<compile_context>
chip_gen: v5e
topology: v5e:2x2
jax: 0.10.0
libtpu: 0.0.40
codegen_flags: <defaults>
</compile_context>

<pallas_src>
import functools

import jax
import jax.numpy as jnp
import numpy as np
from jax import lax
from jax.experimental import pallas as pl
from jax.experimental.pallas import tpu as pltpu

LN_EPS = 1e-5
FORGET_BIAS = 1.0


def _lstm_cell_kernel(num_hidden, samples_per_block,
                      p_ref,                 # (bt, Cin*k*k + NH*k*k, HW)  matmul dtype
                      w_ref,                 # (8*NH, Cin*k*k + NH*k*k)    matmul dtype (block-diag)
                      b_ref,                 # (8*NH, 1)                   f32 conv biases [bx; bh]
                      gx_ref, betax_ref,     # (4*NH, HW)                  LayerNorm affine for conv_x
                      gh_ref, betah_ref,     # (4*NH, HW)                  LayerNorm affine for conv_h
                      c_ref,                 # (bt, NH, HW)
                      c_out_ref, h_out_ref): # (bt, NH, HW) each
    nh = num_hidden
    c4 = 4 * nh

    for s in range(samples_per_block):       # static unroll over samples in this block
        # ---- fused conv_x / conv_h: one MXU matmul, lanes = HW ----
        y = jnp.dot(w_ref[...], p_ref[s], preferred_element_type=jnp.float32)  # (8NH, HW) f32
        y = y + b_ref[...]                    # per-channel bias, broadcast along lanes

        yx = y[:c4]                           # conv_x output (4NH, HW)
        yh = y[c4:]                           # conv_h output (4NH, HW)

        # ---- LayerNorm over all 4NH*HW elements of the sample (center once, reuse) ----
        mx = jnp.mean(yx)
        yxc = yx - mx
        vx = jnp.mean(yxc * yxc)
        yx = yxc * lax.rsqrt(vx + LN_EPS) * gx_ref[...] + betax_ref[...]

        mh = jnp.mean(yh)
        yhc = yh - mh
        vh = jnp.mean(yhc * yhc)
        yh = yhc * lax.rsqrt(vh + LN_EPS) * gh_ref[...] + betah_ref[...]

        # ---- LSTM gates: channel groups live on the sublane axis (multiples of 8) ----
        i_t = jax.nn.sigmoid(yx[0 * nh:1 * nh] + yh[0 * nh:1 * nh])
        f_t = jax.nn.sigmoid(yx[1 * nh:2 * nh] + yh[1 * nh:2 * nh] + FORGET_BIAS)
        g_t = jnp.tanh(yx[2 * nh:3 * nh] + yh[2 * nh:3 * nh])

        c_prev = c_ref[s]
        c_new = f_t * c_prev + i_t * g_t
        o_t = jax.nn.sigmoid(yx[3 * nh:4 * nh] + yh[3 * nh:4 * nh] + c_new)
        h_new = o_t * jnp.tanh(c_new)

        c_out_ref[s] = c_new
        h_out_ref[s] = h_new


def _im2col(x_nchw, k, pad):
    """(B,C,H,W) -> (B, C*k*k, H*W), channels-major; ordering matches OIHW weight reshape."""
    B, C, H, W = x_nchw.shape
    xp = jnp.pad(x_nchw, ((0, 0), (0, 0), (pad, pad), (pad, pad)))
    cols = []
    for dy in range(k):
        for dx in range(k):
            cols.append(xp[:, :, dy:dy + H, dx:dx + W])       # (B,C,H,W)
    p = jnp.stack(cols, axis=2)                                # (B, C, k*k, H, W)
    return p.reshape(B, C * k * k, H * W)                      # index = c*k*k + ky*k + kx


class LSTMCellPallas:
    """Pallas port of the ConvLSTM LSTMCell (stride must be 1, odd filter size)."""

    def __init__(self, key, in_channel, num_hidden, height, width, filter_size, stride,
                 matmul_dtype=jnp.bfloat16, samples_per_block=1):
        assert stride == 1, "stride=1 assumed (output spatial dims must equal input)"
        assert filter_size % 2 == 1, "padding=filter_size//2 only preserves dims for odd filters"
        self.in_channel = in_channel
        self.num_hidden = num_hidden
        self.height = height
        self.width = width
        self.k = filter_size
        self.pad = filter_size // 2
        self.matmul_dtype = matmul_dtype          # bf16 recommended on v6e/v7x; f32 everywhere valid
        self.samples_per_block = samples_per_block

        ks = jax.random.split(key, 8)
        oc = 4 * num_hidden
        # Conv2d weights (OIHW) + bias, LayerNorm gamma/beta over [4*NH, H, W].
        self.wx = 0.1 * jax.random.normal(ks[0], (oc, in_channel, self.k, self.k), jnp.float32)
        self.bx = 0.1 * jax.random.normal(ks[1], (oc,), jnp.float32)
        self.wh = 0.1 * jax.random.normal(ks[2], (oc, num_hidden, self.k, self.k), jnp.float32)
        self.bh = 0.1 * jax.random.normal(ks[3], (oc,), jnp.float32)
        self.ln_gx = 1.0 + 0.1 * jax.random.normal(ks[4], (oc, height, width), jnp.float32)
        self.ln_bx = 0.1 * jax.random.normal(ks[5], (oc, height, width), jnp.float32)
        self.ln_gh = 1.0 + 0.1 * jax.random.normal(ks[6], (oc, height, width), jnp.float32)
        self.ln_bh = 0.1 * jax.random.normal(ks[7], (oc, height, width), jnp.float32)

    # -------- Pallas forward --------
    def __call__(self, x_t, h_t, c_t):
        B = x_t.shape[0]
        H, W, k, nh = self.height, self.width, self.k, self.num_hidden
        HW = H * W
        oc = 4 * nh
        ckk = self.in_channel * k * k
        hkk = nh * k * k
        ktot = ckk + hkk
        bt = self.samples_per_block
        assert B % bt == 0, "samples_per_block must divide batch"
        mdt = self.matmul_dtype

        # Glue (plain JAX): im2col patches concatenated along the contraction axis,
        # block-diagonal fused weight, channels-major LN affines / cell state (no transposes).
        px = _im2col(x_t, k, self.pad)                           # (B, Cin*k*k, HW)
        ph = _im2col(h_t, k, self.pad)                           # (B, NH*k*k,  HW)
        p = jnp.concatenate([px, ph], axis=1).astype(mdt)        # (B, ktot, HW)

        wx2 = self.wx.reshape(oc, ckk)
        wh2 = self.wh.reshape(oc, hkk)
        w = jnp.concatenate(
            [jnp.concatenate([wx2, jnp.zeros((oc, hkk), jnp.float32)], axis=1),
             jnp.concatenate([jnp.zeros((oc, ckk), jnp.float32), wh2], axis=1)],
            axis=0).astype(mdt)                                  # (8NH, ktot) block-diagonal
        b = jnp.concatenate([self.bx, self.bh]).reshape(2 * oc, 1)

        gx2 = self.ln_gx.reshape(oc, HW)
        bxl = self.ln_bx.reshape(oc, HW)
        gh2 = self.ln_gh.reshape(oc, HW)
        bhl = self.ln_bh.reshape(oc, HW)
        c2 = c_t.reshape(B, nh, HW)                              # channels-major, no transpose

        kernel = functools.partial(_lstm_cell_kernel, nh, bt)

        shared = lambda i: (0, 0)
        batched = lambda i: (i, 0, 0)

        c_new2, h_new2 = pl.pallas_call(
            kernel,
            out_shape=(jax.ShapeDtypeStruct((B, nh, HW), jnp.float32),
                       jax.ShapeDtypeStruct((B, nh, HW), jnp.float32)),
            grid_spec=pltpu.PrefetchScalarGridSpec(
                num_scalar_prefetch=0,
                grid=(B // bt,),
                in_specs=[
                    pl.BlockSpec((bt, ktot, HW), batched),   # fused patches
                    pl.BlockSpec((2 * oc, ktot), shared),    # block-diagonal weight
                    pl.BlockSpec((2 * oc, 1), shared),       # conv biases
                    pl.BlockSpec((oc, HW), shared),          # LN gamma (x)
                    pl.BlockSpec((oc, HW), shared),          # LN beta  (x)
                    pl.BlockSpec((oc, HW), shared),          # LN gamma (h)
                    pl.BlockSpec((oc, HW), shared),          # LN beta  (h)
                    pl.BlockSpec((bt, nh, HW), batched),     # c_t
                ],
                out_specs=[
                    pl.BlockSpec((bt, nh, HW), batched),
                    pl.BlockSpec((bt, nh, HW), batched),
                ],
            ),
            compiler_params=pltpu.CompilerParams(
                dimension_semantics=("parallel",)),
        )(p, w, b, gx2, bxl, gh2, bhl, c2)

        # Back to NCHW (pure reshape, no transpose needed).
        c_new = c_new2.reshape(B, nh, H, W)
        h_new = h_new2.reshape(B, nh, H, W)
        return c_new, h_new

    # -------- pure-JAX reference (for verification) --------
    def reference(self, x_t, h_t, c_t):
        def conv_ln(x, w, b, g, beta):
            y = lax.conv_general_dilated(
                x, w, window_strides=(1, 1),
                padding=[(self.pad, self.pad), (self.pad, self.pad)],
                dimension_numbers=("NCHW", "OIHW", "NCHW"))
            y = y + b[None, :, None, None]
            m = jnp.mean(y, axis=(1, 2, 3), keepdims=True)
            v = jnp.mean((y - m) ** 2, axis=(1, 2, 3), keepdims=True)
            return (y - m) * lax.rsqrt(v + LN_EPS) * g[None] + beta[None]

        xc = conv_ln(x_t, self.wx, self.bx, self.ln_gx, self.ln_bx)
        hc = conv_ln(h_t, self.wh, self.bh, self.ln_gh, self.ln_bh)
        i_x, f_x, g_x, o_x = jnp.split(xc, 4, axis=1)
        i_h, f_h, g_h, o_h = jnp.split(hc, 4, axis=1)
        i_t = jax.nn.sigmoid(i_x + i_h)
        f_t = jax.nn.sigmoid(f_x + f_h + FORGET_BIAS)
        g_t = jnp.tanh(g_x + g_h)
        c_new = f_t * c_t + i_t * g_t
        o_t = jax.nn.sigmoid(o_x + o_h + c_new)
        h_new = o_t * jnp.tanh(c_new)
        return c_new, h_new


if __name__ == "__main__":
    key = jax.random.PRNGKey(0)
    k_param, k_x, k_h, k_c = jax.random.split(key, 4)

    B, C_in, NH, Hh, Ww, K = 2, 4, 8, 16, 16, 3
    cell = LSTMCellPallas(k_param, in_channel=C_in, num_hidden=NH,
                          height=Hh, width=Ww, filter_size=K, stride=1,
                          matmul_dtype=jnp.float32, samples_per_block=1)

    x_t = jax.random.normal(k_x, (B, C_in, Hh, Ww), jnp.float32)
    h_t = jax.random.normal(k_h, (B, NH, Hh, Ww), jnp.float32)
    c_t = jax.random.normal(k_c, (B, NH, Hh, Ww), jnp.float32)

    c_ref, h_ref = cell.reference(x_t, h_t, c_t)

    # 1) f32 matmul path, one sample per grid step: tight check.
    c_new, h_new = cell(x_t, h_t, c_t)
    jax.block_until_ready((c_new, h_new))
    np.testing.assert_allclose(np.asarray(c_new), np.asarray(c_ref), atol=2e-4, rtol=2e-4)
    np.testing.assert_allclose(np.asarray(h_new), np.asarray(h_ref), atol=2e-4, rtol=2e-4)

    # 2) bf16 matmul operands (v6e/v7x fast path) + whole batch folded into one grid step:
    #    looser tolerance because of bf16 operand rounding (accumulation stays f32).
    cell.matmul_dtype = jnp.bfloat16
    cell.samples_per_block = 2
    c_bf, h_bf = cell(x_t, h_t, c_t)
    jax.block_until_ready((c_bf, h_bf))
    np.testing.assert_allclose(np.asarray(c_bf), np.asarray(c_ref), atol=7e-2, rtol=7e-2)
    np.testing.assert_allclose(np.asarray(h_bf), np.asarray(h_ref), atol=7e-2, rtol=7e-2)

    print("KERNEL_OK")
</pallas_src>

<mosaic_0001>
module attributes {stable_mosaic.version = 11 : i64} {
  func.func @_lstm_cell_kernel(%arg0: i32, %arg1: memref<1x108x256xf32, #tpu.memory_space<vmem>>, %arg2: memref<64x108xf32, #tpu.memory_space<vmem>>, %arg3: memref<64x1xf32, #tpu.memory_space<vmem>>, %arg4: memref<32x256xf32, #tpu.memory_space<vmem>>, %arg5: memref<32x256xf32, #tpu.memory_space<vmem>>, %arg6: memref<32x256xf32, #tpu.memory_space<vmem>>, %arg7: memref<32x256xf32, #tpu.memory_space<vmem>>, %arg8: memref<1x8x256xf32, #tpu.memory_space<vmem>>, %arg9: memref<1x8x256xf32, #tpu.memory_space<vmem>>, %arg10: memref<1x8x256xf32, #tpu.memory_space<vmem>>) attributes {dimension_semantics = [#tpu.dimension_semantics<parallel>], iteration_bounds = array<i64: 2>, scalar_prefetch = 0 : i64, scratch_operands = 0 : i64, tpu.core_type = #tpu.core_type<tc>, window_params = [{transform_indices = @transform_0, window_bounds = array<i64: 1, 108, 256>}, {pipeline_mode = #tpu.pipeline_mode<synchronous>, transform_indices = @transform_1, window_bounds = array<i64: 64, 108>}, {pipeline_mode = #tpu.pipeline_mode<synchronous>, transform_indices = @transform_2, window_bounds = array<i64: 64, 1>}, {pipeline_mode = #tpu.pipeline_mode<synchronous>, transform_indices = @transform_3, window_bounds = array<i64: 32, 256>}, {pipeline_mode = #tpu.pipeline_mode<synchronous>, transform_indices = @transform_4, window_bounds = array<i64: 32, 256>}, {pipeline_mode = #tpu.pipeline_mode<synchronous>, transform_indices = @transform_5, window_bounds = array<i64: 32, 256>}, {pipeline_mode = #tpu.pipeline_mode<synchronous>, transform_indices = @transform_6, window_bounds = array<i64: 32, 256>}, {transform_indices = @transform_7, window_bounds = array<i64: 1, 8, 256>}, {transform_indices = @transform_8, window_bounds = array<i64: 1, 8, 256>}, {transform_indices = @transform_9, window_bounds = array<i64: 1, 8, 256>}]} {
    %c0 = arith.constant 0 : index
    %c0_0 = arith.constant 0 : index
    %0 = vector.load %arg2[%c0, %c0_0] : memref<64x108xf32, #tpu.memory_space<vmem>>, vector<64x108xf32>
    %c0_1 = arith.constant 0 : index
    %c0_2 = arith.constant 0 : index
    %c0_3 = arith.constant 0 : index
    %1 = vector.load %arg1[%c0_1, %c0_2, %c0_3] : memref<1x108x256xf32, #tpu.memory_space<vmem>>, vector<1x108x256xf32>
    %2 = vector.shape_cast %1 : vector<1x108x256xf32> to vector<108x256xf32>
    %cst = arith.constant dense<0.000000e+00> : vector<64x256xf32>
    %3 = tpu.matmul %0, %2, %cst {dimension_numbers = #tpu.dot_dimension_numbers<[1], [0], [0], [1], [0, 0, 1, 1], [], []>} : vector<64x108xf32>, vector<108x256xf32>, vector<64x256xf32> -> vector<64x256xf32>
    %c0_4 = arith.constant 0 : index
    %c0_5 = arith.constant 0 : index
    %4 = vector.load %arg3[%c0_4, %c0_5] : memref<64x1xf32, #tpu.memory_space<vmem>>, vector<64x1xf32>
    %5 = vector.broadcast %4 : vector<64x1xf32> to vector<64x256xf32>
    %6 = arith.addf %3, %5 : vector<64x256xf32>
    %7 = vector.extract_strided_slice %6 {offsets = [0, 0], sizes = [32, 256], strides = [1, 1]} : vector<64x256xf32> to vector<32x256xf32>
    %8 = vector.extract_strided_slice %6 {offsets = [32, 0], sizes = [32, 256], strides = [1, 1]} : vector<64x256xf32> to vector<32x256xf32>
    %9 = vector.shape_cast %7 : vector<32x256xf32> to vector<1x32x256xf32>
    %cst_6 = arith.constant dense<0.000000e+00> : vector<1xf32>
    %10 = vector.multi_reduction <add>, %9, %cst_6 [1, 2] : vector<1x32x256xf32> to vector<1xf32>
    %11 = vector.shape_cast %10 : vector<1xf32> to vector<1x1x1xf32>
    %12 = vector.extract %11[0, 0, 0] : f32 from vector<1x1x1xf32>
    %cst_7 = arith.constant 8.192000e+03 : f32
    %13 = arith.divf %12, %cst_7 : f32
    %14 = vector.broadcast %13 : f32 to vector<32x256xf32>
    %15 = arith.subf %7, %14 : vector<32x256xf32>
    %16 = arith.mulf %15, %15 : vector<32x256xf32>
    %17 = vector.shape_cast %16 : vector<32x256xf32> to vector<1x32x256xf32>
    %cst_8 = arith.constant dense<0.000000e+00> : vector<1xf32>
    %18 = vector.multi_reduction <add>, %17, %cst_8 [1, 2] : vector<1x32x256xf32> to vector<1xf32>
    %19 = vector.shape_cast %18 : vector<1xf32> to vector<1x1x1xf32>
    %20 = vector.extract %19[0, 0, 0] : f32 from vector<1x1x1xf32>
    %cst_9 = arith.constant 8.192000e+03 : f32
    %21 = arith.divf %20, %cst_9 : f32
    %cst_10 = arith.constant 9.99999974E-6 : f32
    %22 = arith.addf %21, %cst_10 : f32
    %23 = math.rsqrt %22 : f32
    %24 = vector.broadcast %23 : f32 to vector<32x256xf32>
    %25 = arith.mulf %15, %24 : vector<32x256xf32>
    %c0_11 = arith.constant 0 : index
    %c0_12 = arith.constant 0 : index
    %26 = vector.load %arg4[%c0_11, %c0_12] : memref<32x256xf32, #tpu.memory_space<vmem>>, vector<32x256xf32>
    %27 = arith.mulf %25, %26 : vector<32x256xf32>
    %c0_13 = arith.constant 0 : index
    %c0_14 = arith.constant 0 : index
    %28 = vector.load %arg5[%c0_13, %c0_14] : memref<32x256xf32, #tpu.memory_space<vmem>>, vector<32x256xf32>
    %29 = arith.addf %27, %28 : vector<32x256xf32>
    %30 = vector.shape_cast %8 : vector<32x256xf32> to vector<1x32x256xf32>
    %cst_15 = arith.constant dense<0.000000e+00> : vector<1xf32>
    %31 = vector.multi_reduction <add>, %30, %cst_15 [1, 2] : vector<1x32x256xf32> to vector<1xf32>
    %32 = vector.shape_cast %31 : vector<1xf32> to vector<1x1x1xf32>
    %33 = vector.extract %32[0, 0, 0] : f32 from vector<1x1x1xf32>
    %cst_16 = arith.constant 8.192000e+03 : f32
    %34 = arith.divf %33, %cst_16 : f32
    %35 = vector.broadcast %34 : f32 to vector<32x256xf32>
    %36 = arith.subf %8, %35 : vector<32x256xf32>
    %37 = arith.mulf %36, %36 : vector<32x256xf32>
    %38 = vector.shape_cast %37 : vector<32x256xf32> to vector<1x32x256xf32>
    %cst_17 = arith.constant dense<0.000000e+00> : vector<1xf32>
    %39 = vector.multi_reduction <add>, %38, %cst_17 [1, 2] : vector<1x32x256xf32> to vector<1xf32>
    %40 = vector.shape_cast %39 : vector<1xf32> to vector<1x1x1xf32>
    %41 = vector.extract %40[0, 0, 0] : f32 from vector<1x1x1xf32>
    %cst_18 = arith.constant 8.192000e+03 : f32
    %42 = arith.divf %41, %cst_18 : f32
    %cst_19 = arith.constant 9.99999974E-6 : f32
    %43 = arith.addf %42, %cst_19 : f32
    %44 = math.rsqrt %43 : f32
    %45 = vector.broadcast %44 : f32 to vector<32x256xf32>
    %46 = arith.mulf %36, %45 : vector<32x256xf32>
    %c0_20 = arith.constant 0 : index
    %c0_21 = arith.constant 0 : index
    %47 = vector.load %arg6[%c0_20, %c0_21] : memref<32x256xf32, #tpu.memory_space<vmem>>, vector<32x256xf32>
    %48 = arith.mulf %46, %47 : vector<32x256xf32>
    %c0_22 = arith.constant 0 : index
    %c0_23 = arith.constant 0 : index
    %49 = vector.load %arg7[%c0_22, %c0_23] : memref<32x256xf32, #tpu.memory_space<vmem>>, vector<32x256xf32>
    %50 = arith.addf %48, %49 : vector<32x256xf32>
    %51 = vector.extract_strided_slice %29 {offsets = [0, 0], sizes = [8, 256], strides = [1, 1]} : vector<32x256xf32> to vector<8x256xf32>
    %52 = vector.extract_strided_slice %50 {offsets = [0, 0], sizes = [8, 256], strides = [1, 1]} : vector<32x256xf32> to vector<8x256xf32>
    %53 = arith.addf %51, %52 : vector<8x256xf32>
    %54 = arith.negf %53 : vector<8x256xf32>
    %55 = math.exp %54 : vector<8x256xf32>
    %cst_24 = arith.constant 1.000000e+00 : f32
    %56 = vector.broadcast %cst_24 : f32 to vector<8x256xf32>
    %57 = arith.addf %56, %55 : vector<8x256xf32>
    %58 = arith.divf %56, %57 : vector<8x256xf32>
    %59 = vector.extract_strided_slice %29 {offsets = [8, 0], sizes = [8, 256], strides = [1, 1]} : vector<32x256xf32> to vector<8x256xf32>
    %60 = vector.extract_strided_slice %50 {offsets = [8, 0], sizes = [8, 256], strides = [1, 1]} : vector<32x256xf32> to vector<8x256xf32>
    %61 = arith.addf %59, %60 : vector<8x256xf32>
    %cst_25 = arith.constant 1.000000e+00 : f32
    %62 = vector.broadcast %cst_25 : f32 to vector<8x256xf32>
    %63 = arith.addf %61, %62 : vector<8x256xf32>
    %64 = arith.negf %63 : vector<8x256xf32>
    %65 = math.exp %64 : vector<8x256xf32>
    %cst_26 = arith.constant 1.000000e+00 : f32
    %66 = vector.broadcast %cst_26 : f32 to vector<8x256xf32>
    %67 = arith.addf %66, %65 : vector<8x256xf32>
    %68 = arith.divf %66, %67 : vector<8x256xf32>
    %69 = vector.extract_strided_slice %29 {offsets = [16, 0], sizes = [8, 256], strides = [1, 1]} : vector<32x256xf32> to vector<8x256xf32>
    %70 = vector.extract_strided_slice %50 {offsets = [16, 0], sizes = [8, 256], strides = [1, 1]} : vector<32x256xf32> to vector<8x256xf32>
    %71 = arith.addf %69, %70 : vector<8x256xf32>
    %72 = math.tanh %71 : vector<8x256xf32>
    %c0_27 = arith.constant 0 : index
    %c0_28 = arith.constant 0 : index
    %c0_29 = arith.constant 0 : index
    %73 = vector.load %arg8[%c0_27, %c0_28, %c0_29] : memref<1x8x256xf32, #tpu.memory_space<vmem>>, vector<1x8x256xf32>
    %74 = vector.shape_cast %73 : vector<1x8x256xf32> to vector<8x256xf32>
    %75 = arith.mulf %68, %74 : vector<8x256xf32>
    %76 = arith.mulf %58, %72 : vector<8x256xf32>
    %77 = arith.addf %75, %76 : vector<8x256xf32>
    %78 = vector.extract_strided_slice %29 {offsets = [24, 0], sizes = [8, 256], strides = [1, 1]} : vector<32x256xf32> to vector<8x256xf32>
    %79 = vector.extract_strided_slice %50 {offsets = [24, 0], sizes = [8, 256], strides = [1, 1]} : vector<32x256xf32> to vector<8x256xf32>
    %80 = arith.addf %78, %79 : vector<8x256xf32>
    %81 = arith.addf %80, %77 : vector<8x256xf32>
    %82 = arith.negf %81 : vector<8x256xf32>
    %83 = math.exp %82 : vector<8x256xf32>
    %cst_30 = arith.constant 1.000000e+00 : f32
    %84 = vector.broadcast %cst_30 : f32 to vector<8x256xf32>
    %85 = arith.addf %84, %83 : vector<8x256xf32>
    %86 = arith.divf %84, %85 : vector<8x256xf32>
    %87 = math.tanh %77 : vector<8x256xf32>
    %88 = arith.mulf %86, %87 : vector<8x256xf32>
    %c0_31 = arith.constant 0 : index
    %c0_32 = arith.constant 0 : index
    %c0_33 = arith.constant 0 : index
    %89 = vector.load %arg9[%c0_31, %c0_32, %c0_33] : memref<1x8x256xf32, #tpu.memory_space<vmem>>, vector<1x8x256xf32>
    %90 = vector.shape_cast %89 : vector<1x8x256xf32> to vector<8x256xf32>
    %91 = vector.shape_cast %77 : vector<8x256xf32> to vector<1x8x256xf32>
    tpu.vector_store %arg9[%c0_31, %c0_32, %c0_33], %91 {strides = array<i32>} : memref<1x8x256xf32, #tpu.memory_space<vmem>>, vector<1x8x256xf32>,
    %c0_34 = arith.constant 0 : index
    %c0_35 = arith.constant 0 : index
    %c0_36 = arith.constant 0 : index
    %92 = vector.load %arg10[%c0_34, %c0_35, %c0_36] : memref<1x8x256xf32, #tpu.memory_space<vmem>>, vector<1x8x256xf32>
    %93 = vector.shape_cast %92 : vector<1x8x256xf32> to vector<8x256xf32>
    %94 = vector.shape_cast %88 : vector<8x256xf32> to vector<1x8x256xf32>
    tpu.vector_store %arg10[%c0_34, %c0_35, %c0_36], %94 {strides = array<i32>} : memref<1x8x256xf32, #tpu.memory_space<vmem>>, vector<1x8x256xf32>,
    return
  }
  func.func @transform_0(%arg0: i32) -> (i32, i32, i32) {
    %c0_i32 = arith.constant 0 : i32
    %c0_i32_0 = arith.constant 0 : i32
    %c0_i32_1 = arith.constant 0 : i32
    return %arg0, %c0_i32, %c0_i32_0 : i32, i32, i32
  }
  func.func @transform_1(%arg0: i32) -> (i32, i32) {
    %c0_i32 = arith.constant 0 : i32
    %c0_i32_0 = arith.constant 0 : i32
    %c0_i32_1 = arith.constant 0 : i32
    return %c0_i32, %c0_i32_0 : i32, i32
  }
  func.func @transform_2(%arg0: i32) -> (i32, i32) {
    %c0_i32 = arith.constant 0 : i32
    %c0_i32_0 = arith.constant 0 : i32
    %c0_i32_1 = arith.constant 0 : i32
    return %c0_i32, %c0_i32_0 : i32, i32
  }
  func.func @transform_3(%arg0: i32) -> (i32, i32) {
    %c0_i32 = arith.constant 0 : i32
    %c0_i32_0 = arith.constant 0 : i32
    %c0_i32_1 = arith.constant 0 : i32
    return %c0_i32, %c0_i32_0 : i32, i32
  }
  func.func @transform_4(%arg0: i32) -> (i32, i32) {
    %c0_i32 = arith.constant 0 : i32
    %c0_i32_0 = arith.constant 0 : i32
    %c0_i32_1 = arith.constant 0 : i32
    return %c0_i32, %c0_i32_0 : i32, i32
  }
  func.func @transform_5(%arg0: i32) -> (i32, i32) {
    %c0_i32 = arith.constant 0 : i32
    %c0_i32_0 = arith.constant 0 : i32
    %c0_i32_1 = arith.constant 0 : i32
    return %c0_i32, %c0_i32_0 : i32, i32
  }
  func.func @transform_6(%arg0: i32) -> (i32, i32) {
    %c0_i32 = arith.constant 0 : i32
    %c0_i32_0 = arith.constant 0 : i32
    %c0_i32_1 = arith.constant 0 : i32
    return %c0_i32, %c0_i32_0 : i32, i32
  }
  func.func @transform_7(%arg0: i32) -> (i32, i32, i32) {
    %c0_i32 = arith.constant 0 : i32
    %c0_i32_0 = arith.constant 0 : i32
    %c0_i32_1 = arith.constant 0 : i32
    return %arg0, %c0_i32, %c0_i32_0 : i32, i32, i32
  }
  func.func @transform_8(%arg0: i32) -> (i32, i32, i32) {
    %c0_i32 = arith.constant 0 : i32
    %c0_i32_0 = arith.constant 0 : i32
    %c0_i32_1 = arith.constant 0 : i32
    return %arg0, %c0_i32, %c0_i32_0 : i32, i32, i32
  }
  func.func @transform_9(%arg0: i32) -> (i32, i32, i32) {
    %c0_i32 = arith.constant 0 : i32
    %c0_i32_0 = arith.constant 0 : i32
    %c0_i32_1 = arith.constant 0 : i32
    return %arg0, %c0_i32, %c0_i32_0 : i32, i32, i32
  }
}

</mosaic_0001>

<llo_original>
// kernel: tpu_custom_call.1
$region0: #{tpu_custom_call.1}
  #allocation0 [shape = 'u32[]', space=smem, size = 0x4, offset = 0x4, fixed_abs, tag = 'smem constant byte address 0x4 - core index']
  #allocation1 [shape = 'u32[72,128]{1,0:T(1,128)}', space=vmem, size = 0x9000, scoped, tag = 'internal scratch']
  %s0 = inlined_call_operand.vmem [shape: f32[2,108,256], index: 0, kind: input, shape index: {}]
  %s1 = inlined_call_operand.vmem [shape: f32[64,108], index: 1, kind: input, shape index: {}]
  %s2 = inlined_call_operand.vmem [shape: f32[64,1], index: 2, kind: input, shape index: {}]
  %s3 = inlined_call_operand.vmem [shape: f32[32,256], index: 3, kind: input, shape index: {}]
  %s4 = inlined_call_operand.vmem [shape: f32[32,256], index: 4, kind: input, shape index: {}]
  %s5 = inlined_call_operand.vmem [shape: f32[32,256], index: 5, kind: input, shape index: {}]
  %s6 = inlined_call_operand.vmem [shape: f32[32,256], index: 6, kind: input, shape index: {}]
  %s7 = inlined_call_operand.vmem [shape: f32[2,8,256], index: 7, kind: input, shape index: {}]
  %s8 = inlined_call_operand.hbm [shape: f32[2,8,256], index: 8, kind: output, shape index: {0}]
  %s9 = inlined_call_operand.hbm [shape: f32[2,8,256], index: 9, kind: output, shape index: {1}]
  %10 = xla_tuple %s8, %s9
  %s11 = sld [smem:[#allocation0]]
  $region73: #{tpu_custom_call.1} parent=0
    _
  %s13 = ssub.s32 1, %s11
  %s14 = scalar_select 0, %s13, %s11
  $region1: #{tpu_custom_call.1} parent=0
    #allocation2 [shape = 'u8[16384]{0}', space=vmem, size = 0x4000, scoped, tag = 'output window, operand 0']
    #allocation3 [shape = 's32[2]{0}', space=sflag, size = 0x8, scoped, tag = 'scoped memory for tpu_custom_call.1']
    #allocation4 [shape = 'u8[16384]{0}', space=vmem, size = 0x4000, scoped, tag = 'output window, operand 1']
    #allocation5 [shape = 's32[2]{0}', space=sflag, size = 0x8, scoped, tag = 'scoped memory for tpu_custom_call.1']
    %15 = vsyncpa [#allocation3], 0
    %s16 = scalar_lea.sflag [#allocation3], 1
    %17 = vsyncpa %s16, 0
    %18 = vsyncpa [#allocation5], 0
    %s19 = scalar_lea.sflag [#allocation5], 1
    %20 = vsyncpa %s19, 0
    loop: start=0, step=1, limit=4
    $region2: #{tpu_custom_call.1} parent=1 // loop_pre_header
      _
    $region3: #{tpu_custom_call.1} parent=1 // loop_header
      %s22 = sphi 0, %s26
      %p23 = scmp.ge.s32.totalorder %s22, 4
      %s32 = sphi 0, %s34
      %s35 = sphi 0, %s32
      %s36 = sphi 0, %s35
      %s52 = sphi 0, %s36
      %s56 = sphi 0, %s56
      %s58 = sphi 0, %s56
      %s59 = sphi 0, %s58
      %s73 = sphi 0, %s59
      %s77 = sphi 0, %s77
      %s79 = sphi 0, %s77
      %s80 = sphi 0, %s79
      %s94 = sphi 0, %s80
      %s98 = sphi 0, %s98
      %s100 = sphi 0, %s98
      %s101 = sphi 0, %s100
      %s115 = sphi 0, %s101
      %s119 = sphi 0, %s119
      %s121 = sphi 0, %s119
      %s122 = sphi 0, %s121
      %s136 = sphi 0, %s122
      %s140 = sphi 0, %s140
      %s142 = sphi 0, %s140
      %s143 = sphi 0, %s142
      %s157 = sphi 0, %s143
      %s161 = sphi 0, %s161
      %s163 = sphi 0, %s161
      %s164 = sphi 0, %s163
      %s178 = sphi 0, %s164
      %s184 = sphi 0, %s186
      %s187 = sphi 0, %s184
      %s188 = sphi 0, %s187
      %s204 = sphi 0, %s188
      %s210 = sphi 0, %s212
      %s213 = sphi 0, %s210
      %s214 = sphi 0, %s213
      %s230 = sphi 0, %s214
      %s236 = sphi 0, %s238
      %s239 = sphi 0, %s236
      %s240 = sphi 0, %s239
      %s256 = sphi 0, %s240
    $region4: #{tpu_custom_call.1} parent=1 // loop_header_branch
      %25 = sbr.rel (%p23) target = $region8
    $region5: #{tpu_custom_call.1} parent=1 // loop_body
      %s27 = ssub.s32 %s22, 1
      %s28 = ssub.s32 %s22, 2
      %s29 = sadd.s32 %s22, 1
      %s30 = ssub.s32 %s22, %s29
      %p31 = scmp.eq.s32.totalorder %s30, 0
      %s33 = sadd.s32 %s32, 1
      %s34 = scalar_select %p31, %s32, %s33
      %p37 = pneg %p31
      %p38 = scmp.eq.s32.totalorder %s22, 1
      %p39 = por %p37, %p38
      %p40 = scmp.ne.s32.totalorder %s32, %s35
      %p41 = scmp.eq.s32.totalorder %s22, 0
      %p42 = por %p40, %p41
      %p43 = scmp.ne.s32.totalorder %s32, %s35
      %p44 = scmp.eq.s32.totalorder %s27, 1
      %p45 = por %p43, %p44
      %p46 = scmp.ne.s32.totalorder %s35, %s36
      %p47 = scmp.eq.s32.totalorder %s27, 0
      %p48 = por %p46, %p47
      %p49 = scmp.ne.s32.totalorder %s35, %s36
      %p50 = scmp.eq.s32.totalorder %s28, 1
      %p51 = por %p49, %p50
      %p53 = scmp.ne.s32.totalorder %s36, %s52
      %p54 = scmp.eq.s32.totalorder %s28, 0
      %p55 = por %p53, %p54
      %s57 = sadd.s32 %s56, 1
      %p60 = scmp.eq.s32.totalorder %s22, 1
      %p61 = scmp.ne.s32.totalorder %s56, %s58
      %p62 = scmp.eq.s32.totalorder %s22, 0
      %p63 = por %p61, %p62
      %p64 = scmp.ne.s32.totalorder %s56, %s58
      %p65 = scmp.eq.s32.totalorder %s27, 1
      %p66 = por %p64, %p65
      %p67 = scmp.ne.s32.totalorder %s58, %s59
      %p68 = scmp.eq.s32.totalorder %s27, 0
      %p69 = por %p67, %p68
      %p70 = scmp.ne.s32.totalorder %s58, %s59
      %p71 = scmp.eq.s32.totalorder %s28, 1
      %p72 = por %p70, %p71
      %p74 = scmp.ne.s32.totalorder %s59, %s73
      %p75 = scmp.eq.s32.totalorder %s28, 0
      %p76 = por %p74, %p75
      %s78 = sadd.s32 %s77, 1
      %p81 = scmp.eq.s32.totalorder %s22, 1
      %p82 = scmp.ne.s32.totalorder %s77, %s79
      %p83 = scmp.eq.s32.totalorder %s22, 0
      %p84 = por %p82, %p83
      %p85 = scmp.ne.s32.totalorder %s77, %s79
      %p86 = scmp.eq.s32.totalorder %s27, 1
      %p87 = por %p85, %p86
      %p88 = scmp.ne.s32.totalorder %s79, %s80
      %p89 = scmp.eq.s32.totalorder %s27, 0
      %p90 = por %p88, %p89
      %p91 = scmp.ne.s32.totalorder %s79, %s80
      %p92 = scmp.eq.s32.totalorder %s28, 1
      %p93 = por %p91, %p92
      %p95 = scmp.ne.s32.totalorder %s80, %s94
      %p96 = scmp.eq.s32.totalorder %s28, 0
      %p97 = por %p95, %p96
      %s99 = sadd.s32 %s98, 1
      %p102 = scmp.eq.s32.totalorder %s22, 1
      %p103 = scmp.ne.s32.totalorder %s98, %s100
      %p104 = scmp.eq.s32.totalorder %s22, 0
      %p105 = por %p103, %p104
      %p106 = scmp.ne.s32.totalorder %s98, %s100
      %p107 = scmp.eq.s32.totalorder %s27, 1
      %p108 = por %p106, %p107
      %p109 = scmp.ne.s32.totalorder %s100, %s101
      %p110 = scmp.eq.s32.totalorder %s27, 0
      %p111 = por %p109, %p110
      %p112 = scmp.ne.s32.totalorder %s100, %s101
      %p113 = scmp.eq.s32.totalorder %s28, 1
      %p114 = por %p112, %p113
      %p116 = scmp.ne.s32.totalorder %s101, %s115
      %p117 = scmp.eq.s32.totalorder %s28, 0
      %p118 = por %p116, %p117
      %s120 = sadd.s32 %s119, 1
      %p123 = scmp.eq.s32.totalorder %s22, 1
      %p124 = scmp.ne.s32.totalorder %s119, %s121
      %p125 = scmp.eq.s32.totalorder %s22, 0
      %p126 = por %p124, %p125
      %p127 = scmp.ne.s32.totalorder %s119, %s121
      %p128 = scmp.eq.s32.totalorder %s27, 1
      %p129 = por %p127, %p128
      %p130 = scmp.ne.s32.totalorder %s121, %s122
      %p131 = scmp.eq.s32.totalorder %s27, 0
      %p132 = por %p130, %p131
      %p133 = scmp.ne.s32.totalorder %s121, %s122
      %p134 = scmp.eq.s32.totalorder %s28, 1
      %p135 = por %p133, %p134
      %p137 = scmp.ne.s32.totalorder %s122, %s136
      %p138 = scmp.eq.s32.totalorder %s28, 0
      %p139 = por %p137, %p138
      %s141 = sadd.s32 %s140, 1
      %p144 = scmp.eq.s32.totalorder %s22, 1
      %p145 = scmp.ne.s32.totalorder %s140, %s142
      %p146 = scmp.eq.s32.totalorder %s22, 0
      %p147 = por %p145, %p146
      %p148 = scmp.ne.s32.totalorder %s140, %s142
      %p149 = scmp.eq.s32.totalorder %s27, 1
      %p150 = por %p148, %p149
      %p151 = scmp.ne.s32.totalorder %s142, %s143
      %p152 = scmp.eq.s32.totalorder %s27, 0
      %p153 = por %p151, %p152
      %p154 = scmp.ne.s32.totalorder %s142, %s143
      %p155 = scmp.eq.s32.totalorder %s28, 1
      %p156 = por %p154, %p155
      %p158 = scmp.ne.s32.totalorder %s143, %s157
      %p159 = scmp.eq.s32.totalorder %s28, 0
      %p160 = por %p158, %p159
      %s162 = sadd.s32 %s161, 1
      %p165 = scmp.eq.s32.totalorder %s22, 1
      %p166 = scmp.ne.s32.totalorder %s161, %s163
      %p167 = scmp.eq.s32.totalorder %s22, 0
      %p168 = por %p166, %p167
      %p169 = scmp.ne.s32.totalorder %s161, %s163
      %p170 = scmp.eq.s32.totalorder %s27, 1
      %p171 = por %p169, %p170
      %p172 = scmp.ne.s32.totalorder %s163, %s164
      %p173 = scmp.eq.s32.totalorder %s27, 0
      %p174 = por %p172, %p173
      %p175 = scmp.ne.s32.totalorder %s163, %s164
      %p176 = scmp.eq.s32.totalorder %s28, 1
      %p177 = por %p175, %p176
      %p179 = scmp.ne.s32.totalorder %s164, %s178
      %p180 = scmp.eq.s32.totalorder %s28, 0
      %p181 = por %p179, %p180
      %s182 = ssub.s32 %s22, %s29
      %p183 = scmp.eq.s32.totalorder %s182, 0
      %s185 = sadd.s32 %s184, 1
      %s186 = scalar_select %p183, %s184, %s185
      %p189 = pneg %p183
      %p190 = scmp.eq.s32.totalorder %s22, 1
      %p191 = por %p189, %p190
      %p192 = scmp.ne.s32.totalorder %s184, %s187
      %p193 = scmp.eq.s32.totalorder %s22, 0
      %p194 = por %p192, %p193
      %p195 = scmp.ne.s32.totalorder %s184, %s187
      %p196 = scmp.eq.s32.totalorder %s27, 1
      %p197 = por %p195, %p196
      %p198 = scmp.ne.s32.totalorder %s187, %s188
      %p199 = scmp.eq.s32.totalorder %s27, 0
      %p200 = por %p198, %p199
      %p201 = scmp.ne.s32.totalorder %s187, %s188
      %p202 = scmp.eq.s32.totalorder %s28, 1
      %p203 = por %p201, %p202
      %p205 = scmp.ne.s32.totalorder %s188, %s204
      %p206 = scmp.eq.s32.totalorder %s28, 0
      %p207 = por %p205, %p206
      %s208 = ssub.s32 %s22, %s29
      %p209 = scmp.eq.s32.totalorder %s208, 0
      %s211 = sadd.s32 %s210, 1
      %s212 = scalar_select %p209, %s210, %s211
      %p215 = pneg %p209
      %p216 = scmp.eq.s32.totalorder %s22, 1
      %p217 = por %p215, %p216
      %p218 = scmp.ne.s32.totalorder %s210, %s213
      %p219 = scmp.eq.s32.totalorder %s22, 0
      %p220 = por %p218, %p219
      %p221 = scmp.ne.s32.totalorder %s210, %s213
      %p222 = scmp.eq.s32.totalorder %s27, 1
      %p223 = por %p221, %p222
      %p224 = scmp.ne.s32.totalorder %s213, %s214
      %p225 = scmp.eq.s32.totalorder %s27, 0
      %p226 = por %p224, %p225
      %p227 = scmp.ne.s32.totalorder %s213, %s214
      %p228 = scmp.eq.s32.totalorder %s28, 1
      %p229 = por %p227, %p228
      %p231 = scmp.ne.s32.totalorder %s214, %s230
      %p232 = scmp.eq.s32.totalorder %s28, 0
      %p233 = por %p231, %p232
      %s234 = ssub.s32 %s22, %s29
      %p235 = scmp.eq.s32.totalorder %s234, 0
      %s237 = sadd.s32 %s236, 1
      %s238 = scalar_select %p235, %s236, %s237
      %p241 = pneg %p235
      %p242 = scmp.eq.s32.totalorder %s22, 1
      %p243 = por %p241, %p242
      %p244 = scmp.ne.s32.totalorder %s236, %s239
      %p245 = scmp.eq.s32.totalorder %s22, 0
      %p246 = por %p244, %p245
      %p247 = scmp.ne.s32.totalorder %s236, %s239
      %p248 = scmp.eq.s32.totalorder %s27, 1
      %p249 = por %p247, %p248
      %p250 = scmp.ne.s32.totalorder %s239, %s240
      %p251 = scmp.eq.s32.totalorder %s27, 0
      %p252 = por %p250, %p251
      %p253 = scmp.ne.s32.totalorder %s239, %s240
      %p254 = scmp.eq.s32.totalorder %s28, 1
      %p255 = por %p253, %p254
      %p257 = scmp.ne.s32.totalorder %s240, %s256
      %p258 = scmp.eq.s32.totalorder %s28, 0
      %p259 = por %p257, %p258
      %p260 = scmp.le.s32.totalorder 1, %s22
      %p261 = scmp.lt.s32.totalorder %s22, 3
      %p262 = pnand %p260, %p261
      %p263 = pneg %p262
      // Predicated region
      $region9: #{tpu_custom_call.1} parent=5 // pred_check
        _
      $region10: #{tpu_custom_call.1} parent=5 // pred_check_branch
        %265 = sbr.rel (%p262) target = $region12
      $region11: #{tpu_custom_call.1} parent=5 // pred_region
        %s266 = ssub.s32 %s22, 1
        // Predicated region
        $region13: #{tpu_custom_call.1} parent=11 // pred_check
          %p267 = pneg %p69
        $region14: #{tpu_custom_call.1} parent=11 // pred_check_branch
          %269 = sbr.rel (%p267) target = $region16
        $region15: #{tpu_custom_call.1} parent=11 // pred_region
          _
        $region16: #{tpu_custom_call.1} parent=11 // pred_fallthru
          _
        // Predicated region
        $region17: #{tpu_custom_call.1} parent=11 // pred_check
          %p270 = pneg %p90
        $region18: #{tpu_custom_call.1} parent=11 // pred_check_branch
          %272 = sbr.rel (%p270) target = $region20
        $region19: #{tpu_custom_call.1} parent=11 // pred_region
          _
        $region20: #{tpu_custom_call.1} parent=11 // pred_fallthru
          _
        // Predicated region
        $region21: #{tpu_custom_call.1} parent=11 // pred_check
          %p273 = pneg %p111
        $region22: #{tpu_custom_call.1} parent=11 // pred_check_branch
          %275 = sbr.rel (%p273) target = $region24
        $region23: #{tpu_custom_call.1} parent=11 // pred_region
          _
        $region24: #{tpu_custom_call.1} parent=11 // pred_fallthru
          _
        // Predicated region
        $region25: #{tpu_custom_call.1} parent=11 // pred_check
          %p276 = pneg %p132
        $region26: #{tpu_custom_call.1} parent=11 // pred_check_branch
          %278 = sbr.rel (%p276) target = $region28
        $region27: #{tpu_custom_call.1} parent=11 // pred_region
          _
        $region28: #{tpu_custom_call.1} parent=11 // pred_fallthru
          _
        // Predicated region
        $region29: #{tpu_custom_call.1} parent=11 // pred_check
          %p279 = pneg %p153
        $region30: #{tpu_custom_call.1} parent=11 // pred_check_branch
          %281 = sbr.rel (%p279) target = $region32
        $region31: #{tpu_custom_call.1} parent=11 // pred_region
          _
        $region32: #{tpu_custom_call.1} parent=11 // pred_fallthru
          _
        // Predicated region
        $region33: #{tpu_custom_call.1} parent=11 // pred_check
          %p282 = pneg %p174
        $region34: #{tpu_custom_call.1} parent=11 // pred_check_branch
          %284 = sbr.rel (%p282) target = $region36
        $region35: #{tpu_custom_call.1} parent=11 // pred_region
          _
        $region36: #{tpu_custom_call.1} parent=11 // pred_fallthru
          _
      $region12: #{tpu_custom_call.1} parent=5 // pred_fallthru
        _
      %p285 = scmp.lt.s32.totalorder %s22, 2
      // Predicated region
      $region37: #{tpu_custom_call.1} parent=5 // pred_check
        %p286 = pneg %p285
      $region38: #{tpu_custom_call.1} parent=5 // pred_check_branch
        %288 = sbr.rel (%p286) target = $region40
      $region39: #{tpu_custom_call.1} parent=5 // pred_region
        // Predicated region
        $region41: #{tpu_custom_call.1} parent=39 // pred_check
          %p289 = pneg %p42
        $region42: #{tpu_custom_call.1} parent=39 // pred_check_branch
          %291 = sbr.rel (%p289) target = $region44
        $region43: #{tpu_custom_call.1} parent=39 // pred_region
          %p292 = scmp.lt.s32.totalorder %s22, 1
          %s293 = scalar_select %p292, %s22, 1
          %s294 = smul.addr %s293, 28
          %s295 = smul.addr %s294, 8
          %s296 = scalar_lea.vmem %s0, %s295
        $region44: #{tpu_custom_call.1} parent=39 // pred_fallthru
          _
        // Predicated region
        $region45: #{tpu_custom_call.1} parent=39 // pred_check
          %p297 = pneg %p194
        $region46: #{tpu_custom_call.1} parent=39 // pred_check_branch
          %299 = sbr.rel (%p297) target = $region48
        $region47: #{tpu_custom_call.1} parent=39 // pred_region
          %p300 = scmp.lt.s32.totalorder %s22, 1
          %s301 = scalar_select %p300, %s22, 1
          %s302 = smul.addr %s301, 2
          %s303 = smul.addr %s302, 8
          %s304 = scalar_lea.vmem %s7, %s303
        $region48: #{tpu_custom_call.1} parent=39 // pred_fallthru
          _
      $region40: #{tpu_custom_call.1} parent=5 // pred_fallthru
        _
      %p305 = scmp.le.s32.totalorder 1, %s22
      %p306 = scmp.lt.s32.totalorder %s22, 3
      %p307 = pnand %p305, %p306
      %p308 = pneg %p307
      // Predicated region
      $region49: #{tpu_custom_call.1} parent=5 // pred_check
        _
      $region50: #{tpu_custom_call.1} parent=5 // pred_check_branch
        %310 = sbr.rel (%p307) target = $region52
      $region51: #{tpu_custom_call.1} parent=5 // pred_region
        %s311 = ssub.s32 %s22, 1
        %p312 = scmp.lt.s32.totalorder %s27, 1
        %s313 = scalar_select %p312, %s27, 1
        %s314 = smul.addr %s313, 28
        %s315 = smul.addr %s314, 8
        %s316 = scalar_lea.vmem %s0, %s315
        %p317 = pneg %p48
        %p318 = pneg %p45
        %p319 = pneg %p69
        %p320 = pneg %p66
        %p321 = pneg %p90
        %p322 = pneg %p87
        %p323 = pneg %p111
        %p324 = pneg %p108
        %p325 = pneg %p132
        %p326 = pneg %p129
        %p327 = pneg %p153
        %p328 = pneg %p150
        %p329 = pneg %p174
        %p330 = pneg %p171
        %p331 = scmp.lt.s32.totalorder %s27, 1
        %s332 = scalar_select %p331, %s27, 1
        %s333 = smul.addr %s332, 2
        %s334 = smul.addr %s333, 8
        %s335 = scalar_lea.vmem %s7, %s334
        %p336 = pneg %p200
        %p337 = pneg %p197
        %p338 = pneg %p226
        %p339 = pneg %p223
        %s340 = sand.u32 %s213, 1
        %s341 = scalar_lea.sflag [#allocation3], %s340
        %s342 = sand.u32 %s213, 1
        %s343 = smul.addr %s342, 16
        %s344 = scalar_lea.vmem [#allocation2], %s343
        %p345 = pneg %p252
        %p346 = pneg %p249
        %s347 = sand.u32 %s239, 1
        %s348 = scalar_lea.sflag [#allocation5], %s347
        %s349 = sand.u32 %s239, 1
        %s350 = smul.addr %s349, 16
        %s351 = scalar_lea.vmem [#allocation4], %s350
        %p352 = scmp.lt.s32.totalorder %s27, 1
        %s353 = scalar_select %p352, %s27, 1
        %s354 = smul.addr %s353, 28
        %s355 = smul.addr %s354, 8
        %s356 = scalar_lea.vmem %s0, %s355
        %p357 = scmp.lt.s32.totalorder %s27, 1
        %s358 = scalar_select %p357, %s27, 1
        %s359 = smul.addr %s358, 2
        %s360 = smul.addr %s359, 8
        %s361 = scalar_lea.vmem %s7, %s360
        %v362 = vld [vmem:[%s1] sm:$0xff]
        %v363 = vld [vmem:[%s1 + $0x8] sm:$0xff]
        %v364 = vld [vmem:[%s1 + $0x10] sm:$0xff]
        %v365 = vld [vmem:[%s1 + $0x18] sm:$0xff]
        %v366 = vld [vmem:[%s1 + $0x20] sm:$0xff]
        %v367 = vld [vmem:[%s1 + $0x28] sm:$0xff]
        %v368 = vld [vmem:[%s1 + $0x30] sm:$0xff]
        %v369 = vld [vmem:[%s1 + $0x38] sm:$0xff]
        %v370 = vld [vmem:[%s356] sm:$0xff]
        %v371 = vld [vmem:[%s356 + $0x8] sm:$0xff]
        %v372 = vld [vmem:[%s356 + $0x10] sm:$0xff]
        %v373 = vld [vmem:[%s356 + $0x18] sm:$0xff]
        %v374 = vld [vmem:[%s356 + $0x20] sm:$0xff]
        %v375 = vld [vmem:[%s356 + $0x28] sm:$0xff]
        %v376 = vld [vmem:[%s356 + $0x30] sm:$0xff]
        %v377 = vld [vmem:[%s356 + $0x38] sm:$0xff]
        %v378 = vld [vmem:[%s356 + $0x40] sm:$0xff]
        %v379 = vld [vmem:[%s356 + $0x48] sm:$0xff]
        %v380 = vld [vmem:[%s356 + $0x50] sm:$0xff]
        %v381 = vld [vmem:[%s356 + $0x58] sm:$0xff]
        %v382 = vld [vmem:[%s356 + $0x60] sm:$0xff]
        %v383 = vld [vmem:[%s356 + $0x68] sm:$0xff]
        %v384 = vld [vmem:[%s356 + $0x70] sm:$0xff]
        %v385 = vld [vmem:[%s356 + $0x78] sm:$0xff]
        %v386 = vld [vmem:[%s356 + $0x80] sm:$0xff]
        %v387 = vld [vmem:[%s356 + $0x88] sm:$0xff]
        %v388 = vld [vmem:[%s356 + $0x90] sm:$0xff]
        %v389 = vld [vmem:[%s356 + $0x98] sm:$0xff]
        %v390 = vld [vmem:[%s356 + $0xa0] sm:$0xff]
        %v391 = vld [vmem:[%s356 + $0xa8] sm:$0xff]
        %v392 = vld [vmem:[%s356 + $0xb0] sm:$0xff]
        %v393 = vld [vmem:[%s356 + $0xb8] sm:$0xff]
        %v394 = vld [vmem:[%s356 + $0xc0] sm:$0xff]
        %v395 = vld [vmem:[%s356 + $0xc8] sm:$0xff]
        %v396 = vld [vmem:[%s356 + $0xd0] sm:$0xf]
        %v397 = vld [vmem:[%s356 + $0xd8] sm:$0xf]
        %v398 = vld [vmem:[%s2] sm:$0xff]
        %v399 = vld [vmem:[%s2 + $0x8] sm:$0xff]
        %v400 = vld [vmem:[%s2 + $0x10] sm:$0xff]
        %v401 = vld [vmem:[%s2 + $0x18] sm:$0xff]
        %v402 = vld [vmem:[%s2 + $0x20] sm:$0xff]
        %v403 = vld [vmem:[%s2 + $0x28] sm:$0xff]
        %v404 = vld [vmem:[%s2 + $0x30] sm:$0xff]
        %v405 = vld [vmem:[%s2 + $0x38] sm:$0xff]
        %407 = vset.pattern.permute.xlu0 0
        %408 = vperm.xlu0 %407, %v398
        %v409 = vpop.permute.xlu0 %408
        %412 = vset.pattern.permute.xlu0 0
        %413 = vperm.xlu0 %412, %v399
        %v414 = vpop.permute.xlu0 %413
        %417 = vset.pattern.permute.xlu0 0
        %418 = vperm.xlu0 %417, %v400
        %v419 = vpop.permute.xlu0 %418
        %422 = vset.pattern.permute.xlu0 0
        %423 = vperm.xlu0 %422, %v401
        %v424 = vpop.permute.xlu0 %423
        %427 = vset.pattern.permute.xlu0 0
        %428 = vperm.xlu0 %427, %v402
        %v429 = vpop.permute.xlu0 %428
        %432 = vset.pattern.permute.xlu0 0
        %433 = vperm.xlu0 %432, %v403
        %v434 = vpop.permute.xlu0 %433
        %437 = vset.pattern.permute.xlu0 0
        %438 = vperm.xlu0 %437, %v404
        %v439 = vpop.permute.xlu0 %438
        %442 = vset.pattern.permute.xlu0 0
        %443 = vperm.xlu0 %442, %v405
        %v444 = vpop.permute.xlu0 %443
        %vm446 = vcmask 883712
        %v448 = vsel %vm446, %v362, 0
        %v451 = vsel %vm446, %v363, 0
        %v454 = vsel %vm446, %v364, 0
        %v457 = vsel %vm446, %v365, 0
        %v460 = vsel %vm446, %v366, 0
        %v463 = vsel %vm446, %v367, 0
        %v466 = vsel %vm446, %v368, 0
        %v469 = vsel %vm446, %v369, 0
        %vm471 = vcmask 1043456
        %v473 = vsel %vm471, %v396, 0
        %v476 = vsel %vm471, %v397, 0
        %478 = vmatpush.msra.mxu0 0.0
        %479 = vmatpush.msra.mxu0 0.0
        %480 = vmatpush.msra.mxu0 %v473
        %481 = vmatpush.msra.mxu0 %v394
        %482 = vmatpush.msra.mxu0 %v392
        %483 = vmatpush.msra.mxu0 %v390
        %484 = vmatpush.msra.mxu0 %v388
        %485 = vmatpush.msra.mxu0 %v386
        %486 = vmatpush.msra.mxu0 %v384
        %487 = vmatpush.msra.mxu0 %v382
        %488 = vmatpush.msra.mxu0 %v380
        %489 = vmatpush.msra.mxu0 %v378
        %490 = vmatpush.msra.mxu0 %v376
        %491 = vmatpush.msra.mxu0 %v374
        %492 = vmatpush.msra.mxu0 %v372
        %493 = vmatpush.msra.mxu0 %v370
        %494 = vmatmul.f32.gmra.mxu0 %v448
        %v495 = vpop.f32.mrf.mxu0
        %v496 = vadd.f32 %v409, %v495
        %497 = vmatmul.f32.gmra.mxu0 %v451
        %v498 = vpop.f32.mrf.mxu0
        %v499 = vadd.f32 %v414, %v498
        %500 = vmatmul.f32.gmra.mxu0 %v454
        %v501 = vpop.f32.mrf.mxu0
        %v502 = vadd.f32 %v419, %v501
        %503 = vmatmul.f32.gmra.mxu0 %v457
        %v504 = vpop.f32.mrf.mxu0
        %v505 = vadd.f32 %v424, %v504
        %506 = vmatmul.f32.gmra.mxu0 %v460
        %v507 = vpop.f32.mrf.mxu0
        %v508 = vadd.f32 %v429, %v507
        %509 = vmatmul.f32.gmra.mxu0 %v463
        %v510 = vpop.f32.mrf.mxu0
        %v511 = vadd.f32 %v434, %v510
        %512 = vmatmul.f32.gmra.mxu0 %v466
        %v513 = vpop.f32.mrf.mxu0
        %v514 = vadd.f32 %v439, %v513
        %515 = vmatmul.f32.gmra.mxu0 %v469
        %v516 = vpop.f32.mrf.mxu0
        %v517 = vadd.f32 %v444, %v516
        %518 = vdwg.mxu0
        %519 = vmatpush.msra.mxu0 0.0
        %520 = vmatpush.msra.mxu0 0.0
        %521 = vmatpush.msra.mxu0 %v476
        %522 = vmatpush.msra.mxu0 %v395
        %523 = vmatpush.msra.mxu0 %v393
        %524 = vmatpush.msra.mxu0 %v391
        %525 = vmatpush.msra.mxu0 %v389
        %526 = vmatpush.msra.mxu0 %v387
        %527 = vmatpush.msra.mxu0 %v385
        %528 = vmatpush.msra.mxu0 %v383
        %529 = vmatpush.msra.mxu0 %v381
        %530 = vmatpush.msra.mxu0 %v379
        %531 = vmatpush.msra.mxu0 %v377
        %532 = vmatpush.msra.mxu0 %v375
        %533 = vmatpush.msra.mxu0 %v373
        %534 = vmatpush.msra.mxu0 %v371
        %535 = vmatmul.f32.gmra.mxu0 %v448
        %v536 = vpop.f32.mrf.mxu0
        %v537 = vadd.f32 %v409, %v536
        %538 = vmatmul.f32.gmra.mxu0 %v451
        %v539 = vpop.f32.mrf.mxu0
        %v540 = vadd.f32 %v414, %v539
        %541 = vmatmul.f32.gmra.mxu0 %v454
        %v542 = vpop.f32.mrf.mxu0
        %v543 = vadd.f32 %v419, %v542
        %544 = vmatmul.f32.gmra.mxu0 %v457
        %v545 = vpop.f32.mrf.mxu0
        %v546 = vadd.f32 %v424, %v545
        %547 = vmatmul.f32.gmra.mxu0 %v460
        %v548 = vpop.f32.mrf.mxu0
        %v549 = vadd.f32 %v429, %v548
        %550 = vmatmul.f32.gmra.mxu0 %v463
        %v551 = vpop.f32.mrf.mxu0
        %v552 = vadd.f32 %v434, %v551
        %553 = vmatmul.f32.gmra.mxu0 %v466
        %v554 = vpop.f32.mrf.mxu0
        %v555 = vadd.f32 %v439, %v554
        %556 = vmatmul.f32.gmra.mxu0 %v469
        %v557 = vpop.f32.mrf.mxu0
        %v558 = vadd.f32 %v444, %v557
        %559 = vdwg.mxu0
        %v560 = vadd.f32 %v496, %v537
        %v561 = vadd.f32 %v560, %v499
        %v562 = vadd.f32 %v561, %v540
        %v563 = vadd.f32 %v562, %v502
        %v564 = vadd.f32 %v563, %v543
        %v565 = vadd.f32 %v564, %v505
        %v566 = vadd.f32 %v565, %v546
        %567 = vadd.xlane.f32.xlu0 %v566
        %v568 = vpop.xlane.xlu0 %567
        %v569 = vrot.slane %v568, 4
        %v570 = vadd.f32 %v568, %v569
        %v571 = vrot.slane %v570, 2
        %v572 = vadd.f32 %v570, %v571
        %v573 = vrot.slane %v572, 1
        %v574 = vadd.f32 %v572, %v573
        %s575 = vtos %v574
        %v576 = vrcp.pop 8192.0
        %v577 = vmul.f32 8192.0, %v576
        %v578 = vsub.f32 1.0, %v577
        %v579 = vmul.f32 %v576, %v578
        %v580 = vadd.f32 %v576, %v579
        %vm581 = vweird.f32 %v576
        %v582 = vsel %vm581, %v576, %v580
        %s583 = vtos %v582
        %s584 = smul.f32 %s575, %s583
        %v585 = vstv %s584
        %v586 = vsub.f32 %v496, %v585
        %v587 = vsub.f32 %v537, %v585
        %v588 = vsub.f32 %v499, %v585
        %v589 = vsub.f32 %v540, %v585
        %v590 = vsub.f32 %v502, %v585
        %v591 = vsub.f32 %v543, %v585
        %v592 = vsub.f32 %v505, %v585
        %v593 = vsub.f32 %v546, %v585
        %v594 = vmul.f32 %v586, %v586
        %v595 = vmul.f32 %v587, %v587
        %v596 = vmul.f32 %v588, %v588
        %v597 = vmul.f32 %v589, %v589
        %v598 = vmul.f32 %v590, %v590
        %v599 = vmul.f32 %v591, %v591
        %v600 = vmul.f32 %v592, %v592
        %v601 = vmul.f32 %v593, %v593
        %v602 = vadd.f32 %v594, %v595
        %v603 = vadd.f32 %v602, %v596
        %v604 = vadd.f32 %v603, %v597
        %v605 = vadd.f32 %v604, %v598
        %v606 = vadd.f32 %v605, %v599
        %v607 = vadd.f32 %v606, %v600
        %v608 = vadd.f32 %v607, %v601
        %609 = vadd.xlane.f32.xlu0 %v608
        %v610 = vpop.xlane.xlu0 %609
        %v611 = vrot.slane %v610, 4
        %v612 = vadd.f32 %v610, %v611
        %v613 = vrot.slane %v612, 2
        %v614 = vadd.f32 %v612, %v613
        %v615 = vrot.slane %v614, 1
        %v616 = vadd.f32 %v614, %v615
        %s617 = vtos %v616
        %v618 = vrcp.pop 8192.0
        %v619 = vmul.f32 8192.0, %v618
        %v620 = vsub.f32 1.0, %v619
        %v621 = vmul.f32 %v618, %v620
        %v622 = vadd.f32 %v618, %v621
        %vm623 = vweird.f32 %v618
        %v624 = vsel %vm623, %v618, %v622
        %s625 = vtos %v624
        %s626 = smul.f32 %s617, %s625
        %s627 = sadd.f32 %s626, 1e-05
        %v628 = vstv %s627
        %v629 = vrsqrt.pop %v628
        %v630 = vmul.f32 %v629, %v628
        %v631 = vmul.f32 %v630, %v629
        %v632 = vmul.f32 0.5, %v631
        %v633 = vsub.f32 1.5, %v632
        %v634 = vmul.f32 %v629, %v633
        %vm635 = vweird.f32 %v628
        %vm636 = vweird.f32 %v629
        %vm637 = vmor %vm635, %vm636
        %v638 = vsel %vm637, %v629, %v634
        %s639 = vtos %v638
        %v640 = vstv %s639
        %v641 = vmul.f32 %v586, %v640
        %v642 = vmul.f32 %v587, %v640
        %v643 = vmul.f32 %v588, %v640
        %v644 = vmul.f32 %v589, %v640
        %v645 = vmul.f32 %v590, %v640
        %v646 = vmul.f32 %v591, %v640
        %v647 = vmul.f32 %v592, %v640
        %v648 = vmul.f32 %v593, %v640
        %v649 = vld [vmem:[%s3] sm:$0xff]
        %v650 = vld [vmem:[%s3 + $0x8] sm:$0xff]
        %v651 = vld [vmem:[%s3 + $0x10] sm:$0xff]
        %v652 = vld [vmem:[%s3 + $0x18] sm:$0xff]
        %v653 = vld [vmem:[%s3 + $0x20] sm:$0xff]
        %v654 = vld [vmem:[%s3 + $0x28] sm:$0xff]
        %v655 = vld [vmem:[%s3 + $0x30] sm:$0xff]
        %v656 = vld [vmem:[%s3 + $0x38] sm:$0xff]
        %v657 = vmul.f32 %v641, %v649
        %v658 = vmul.f32 %v642, %v650
        %v659 = vmul.f32 %v643, %v651
        %v660 = vmul.f32 %v644, %v652
        %v661 = vmul.f32 %v645, %v653
        %v662 = vmul.f32 %v646, %v654
        %v663 = vmul.f32 %v647, %v655
        %v664 = vmul.f32 %v648, %v656
        %v665 = vld [vmem:[%s4] sm:$0xff]
        %v666 = vld [vmem:[%s4 + $0x8] sm:$0xff]
        %v667 = vld [vmem:[%s4 + $0x10] sm:$0xff]
        %v668 = vld [vmem:[%s4 + $0x18] sm:$0xff]
        %v669 = vld [vmem:[%s4 + $0x20] sm:$0xff]
        %v670 = vld [vmem:[%s4 + $0x28] sm:$0xff]
        %v671 = vld [vmem:[%s4 + $0x30] sm:$0xff]
        %v672 = vld [vmem:[%s4 + $0x38] sm:$0xff]
        %v673 = vadd.f32 %v657, %v665
        %v674 = vadd.f32 %v658, %v666
        %v675 = vadd.f32 %v659, %v667
        %v676 = vadd.f32 %v660, %v668
        %v677 = vadd.f32 %v661, %v669
        %v678 = vadd.f32 %v662, %v670
        %v679 = vadd.f32 %v663, %v671
        %v680 = vadd.f32 %v664, %v672
        %v681 = vadd.f32 %v508, %v549
        %v682 = vadd.f32 %v681, %v511
        %v683 = vadd.f32 %v682, %v552
        %v684 = vadd.f32 %v683, %v514
        %v685 = vadd.f32 %v684, %v555
        %v686 = vadd.f32 %v685, %v517
        %v687 = vadd.f32 %v686, %v558
        %688 = vadd.xlane.f32.xlu0 %v687
        %v689 = vpop.xlane.xlu0 %688
        %v690 = vrot.slane %v689, 4
        %v691 = vadd.f32 %v689, %v690
        %v692 = vrot.slane %v691, 2
        %v693 = vadd.f32 %v691, %v692
        %v694 = vrot.slane %v693, 1
        %v695 = vadd.f32 %v693, %v694
        %s696 = vtos %v695
        %v697 = vrcp.pop 8192.0
        %v698 = vmul.f32 8192.0, %v697
        %v699 = vsub.f32 1.0, %v698
        %v700 = vmul.f32 %v697, %v699
        %v701 = vadd.f32 %v697, %v700
        %vm702 = vweird.f32 %v697
        %v703 = vsel %vm702, %v697, %v701
        %s704 = vtos %v703
        %s705 = smul.f32 %s696, %s704
        %v706 = vstv %s705
        %v707 = vsub.f32 %v508, %v706
        %v708 = vsub.f32 %v549, %v706
        %v709 = vsub.f32 %v511, %v706
        %v710 = vsub.f32 %v552, %v706
        %v711 = vsub.f32 %v514, %v706
        %v712 = vsub.f32 %v555, %v706
        %v713 = vsub.f32 %v517, %v706
        %v714 = vsub.f32 %v558, %v706
        %v715 = vmul.f32 %v707, %v707
        %v716 = vmul.f32 %v708, %v708
        %v717 = vmul.f32 %v709, %v709
        %v718 = vmul.f32 %v710, %v710
        %v719 = vmul.f32 %v711, %v711
        %v720 = vmul.f32 %v712, %v712
        %v721 = vmul.f32 %v713, %v713
        %v722 = vmul.f32 %v714, %v714
        %v723 = vadd.f32 %v715, %v716
        %v724 = vadd.f32 %v723, %v717
        %v725 = vadd.f32 %v724, %v718
        %v726 = vadd.f32 %v725, %v719
        %v727 = vadd.f32 %v726, %v720
        %v728 = vadd.f32 %v727, %v721
        %v729 = vadd.f32 %v728, %v722
        %730 = vadd.xlane.f32.xlu0 %v729
        %v731 = vpop.xlane.xlu0 %730
        %v732 = vrot.slane %v731, 4
        %v733 = vadd.f32 %v731, %v732
        %v734 = vrot.slane %v733, 2
        %v735 = vadd.f32 %v733, %v734
        %v736 = vrot.slane %v735, 1
        %v737 = vadd.f32 %v735, %v736
        %s738 = vtos %v737
        %v739 = vrcp.pop 8192.0
        %v740 = vmul.f32 8192.0, %v739
        %v741 = vsub.f32 1.0, %v740
        %v742 = vmul.f32 %v739, %v741
        %v743 = vadd.f32 %v739, %v742
        %vm744 = vweird.f32 %v739
        %v745 = vsel %vm744, %v739, %v743
        %s746 = vtos %v745
        %s747 = smul.f32 %s738, %s746
        %s748 = sadd.f32 %s747, 1e-05
        %v749 = vstv %s748
        %v750 = vrsqrt.pop %v749
        %v751 = vmul.f32 %v750, %v749
        %v752 = vmul.f32 %v751, %v750
        %v753 = vmul.f32 0.5, %v752
        %v754 = vsub.f32 1.5, %v753
        %v755 = vmul.f32 %v750, %v754
        %vm756 = vweird.f32 %v749
        %vm757 = vweird.f32 %v750
        %vm758 = vmor %vm756, %vm757
        %v759 = vsel %vm758, %v750, %v755
        %s760 = vtos %v759
        %v761 = vstv %s760
        %v762 = vmul.f32 %v707, %v761
        %v763 = vmul.f32 %v708, %v761
        %v764 = vmul.f32 %v709, %v761
        %v765 = vmul.f32 %v710, %v761
        %v766 = vmul.f32 %v711, %v761
        %v767 = vmul.f32 %v712, %v761
        %v768 = vmul.f32 %v713, %v761
        %v769 = vmul.f32 %v714, %v761
        %v770 = vld [vmem:[%s5] sm:$0xff]
        %v771 = vld [vmem:[%s5 + $0x8] sm:$0xff]
        %v772 = vld [vmem:[%s5 + $0x10] sm:$0xff]
        %v773 = vld [vmem:[%s5 + $0x18] sm:$0xff]
        %v774 = vld [vmem:[%s5 + $0x20] sm:$0xff]
        %v775 = vld [vmem:[%s5 + $0x28] sm:$0xff]
        %v776 = vld [vmem:[%s5 + $0x30] sm:$0xff]
        %v777 = vld [vmem:[%s5 + $0x38] sm:$0xff]
        %v778 = vmul.f32 %v762, %v770
        %v779 = vmul.f32 %v763, %v771
        %v780 = vmul.f32 %v764, %v772
        %v781 = vmul.f32 %v765, %v773
        %v782 = vmul.f32 %v766, %v774
        %v783 = vmul.f32 %v767, %v775
        %v784 = vmul.f32 %v768, %v776
        %v785 = vmul.f32 %v769, %v777
        %v786 = vld [vmem:[%s6] sm:$0xff]
        %v787 = vld [vmem:[%s6 + $0x8] sm:$0xff]
        %v788 = vld [vmem:[%s6 + $0x10] sm:$0xff]
        %v789 = vld [vmem:[%s6 + $0x18] sm:$0xff]
        %v790 = vld [vmem:[%s6 + $0x20] sm:$0xff]
        %v791 = vld [vmem:[%s6 + $0x28] sm:$0xff]
        %v792 = vld [vmem:[%s6 + $0x30] sm:$0xff]
        %v793 = vld [vmem:[%s6 + $0x38] sm:$0xff]
        %v794 = vadd.f32 %v778, %v786
        %v795 = vadd.f32 %v779, %v787
        %v796 = vadd.f32 %v780, %v788
        %v797 = vadd.f32 %v781, %v789
        %v798 = vadd.f32 %v782, %v790
        %v799 = vadd.f32 %v783, %v791
        %v800 = vadd.f32 %v784, %v792
        %v801 = vadd.f32 %v785, %v793
        %v802 = vadd.f32 %v673, %v794
        %v803 = vadd.f32 %v674, %v795
        %v804 = vxor.u32 %v802, 2147483648
        %v805 = vxor.u32 %v803, 2147483648
        %v806 = vmul.f32 %v804, 1.442695
        %v807 = vpow.pop %v806
        %v808 = vmul.f32 %v805, 1.442695
        %v809 = vpow.pop %v808
        %v810 = vadd.f32 %v807, 1.0
        %v811 = vadd.f32 %v809, 1.0
        %v812 = vrcp.pop %v810
        %v813 = vmul.f32 %v810, %v812
        %v814 = vsub.f32 1.0, %v813
        %v815 = vmul.f32 %v812, %v814
        %v816 = vadd.f32 %v812, %v815
        %vm817 = vweird.f32 %v810
        %vm818 = vweird.f32 %v812
        %vm819 = vmor %vm817, %vm818
        %v820 = vsel %vm819, %v812, %v816
        %v821 = vand.u32 2147483647, %v810
        %vm822 = vcmp.eq.f32.partialorder %v821, 8.507059e+37
        %v823 = vand.u32 %v810, 2147483648
        %v824 = vor.u32 1.1754944e-38, %v823
        %v825 = vsel %vm822, %v824, %v820
        %v826 = vmul.f32 1.0, %v825
        %v827 = vrcp.pop %v811
        %v828 = vmul.f32 %v811, %v827
        %v829 = vsub.f32 1.0, %v828
        %v830 = vmul.f32 %v827, %v829
        %v831 = vadd.f32 %v827, %v830
        %vm832 = vweird.f32 %v811
        %vm833 = vweird.f32 %v827
        %vm834 = vmor %vm832, %vm833
        %v835 = vsel %vm834, %v827, %v831
        %v836 = vand.u32 2147483647, %v811
        %vm837 = vcmp.eq.f32.partialorder %v836, 8.507059e+37
        %v838 = vand.u32 %v811, 2147483648
        %v839 = vor.u32 1.1754944e-38, %v838
        %v840 = vsel %vm837, %v839, %v835
        %v841 = vmul.f32 1.0, %v840
        %v842 = vadd.f32 %v675, %v796
        %v843 = vadd.f32 %v676, %v797
        %v844 = vadd.f32 %v842, 1.0
        %v845 = vadd.f32 %v843, 1.0
        %v846 = vxor.u32 %v844, 2147483648
        %v847 = vxor.u32 %v845, 2147483648
        %v848 = vmul.f32 %v846, 1.442695
        %v849 = vpow.pop %v848
        %v850 = vmul.f32 %v847, 1.442695
        %v851 = vpow.pop %v850
        %v852 = vadd.f32 %v849, 1.0
        %v853 = vadd.f32 %v851, 1.0
        %v854 = vrcp.pop %v852
        %v855 = vmul.f32 %v852, %v854
        %v856 = vsub.f32 1.0, %v855
        %v857 = vmul.f32 %v854, %v856
        %v858 = vadd.f32 %v854, %v857
        %vm859 = vweird.f32 %v852
        %vm860 = vweird.f32 %v854
        %vm861 = vmor %vm859, %vm860
        %v862 = vsel %vm861, %v854, %v858
        %v863 = vand.u32 2147483647, %v852
        %vm864 = vcmp.eq.f32.partialorder %v863, 8.507059e+37
        %v865 = vand.u32 %v852, 2147483648
        %v866 = vor.u32 1.1754944e-38, %v865
        %v867 = vsel %vm864, %v866, %v862
        %v868 = vmul.f32 1.0, %v867
        %v869 = vrcp.pop %v853
        %v870 = vmul.f32 %v853, %v869
        %v871 = vsub.f32 1.0, %v870
        %v872 = vmul.f32 %v869, %v871
        %v873 = vadd.f32 %v869, %v872
        %vm874 = vweird.f32 %v853
        %vm875 = vweird.f32 %v869
        %vm876 = vmor %vm874, %vm875
        %v877 = vsel %vm876, %v869, %v873
        %v878 = vand.u32 2147483647, %v853
        %vm879 = vcmp.eq.f32.partialorder %v878, 8.507059e+37
        %v880 = vand.u32 %v853, 2147483648
        %v881 = vor.u32 1.1754944e-38, %v880
        %v882 = vsel %vm879, %v881, %v877
        %v883 = vmul.f32 1.0, %v882
        %v884 = vadd.f32 %v677, %v798
        %v885 = vadd.f32 %v678, %v799
        %v886 = vtanh.pop %v884
        %v887 = vtanh.pop %v885
        %v888 = vld [vmem:[%s361] sm:$0xff]
        %v889 = vld [vmem:[%s361 + $0x8] sm:$0xff]
        %v890 = vmul.f32 %v868, %v888
        %v891 = vmul.f32 %v883, %v889
        %v892 = vmul.f32 %v826, %v886
        %v893 = vmul.f32 %v841, %v887
        %v894 = vadd.f32 %v890, %v892
        %v895 = vadd.f32 %v891, %v893
        %v896 = vadd.f32 %v679, %v800
        %v897 = vadd.f32 %v680, %v801
        %v898 = vadd.f32 %v896, %v894
        %v899 = vadd.f32 %v897, %v895
        %v900 = vxor.u32 %v898, 2147483648
        %v901 = vxor.u32 %v899, 2147483648
        %v902 = vmul.f32 %v900, 1.442695
        %v903 = vpow.pop %v902
        %v904 = vmul.f32 %v901, 1.442695
        %v905 = vpow.pop %v904
        %v906 = vadd.f32 %v903, 1.0
        %v907 = vadd.f32 %v905, 1.0
        %v908 = vrcp.pop %v906
        %v909 = vmul.f32 %v906, %v908
        %v910 = vsub.f32 1.0, %v909
        %v911 = vmul.f32 %v908, %v910
        %v912 = vadd.f32 %v908, %v911
        %vm913 = vweird.f32 %v906
        %vm914 = vweird.f32 %v908
        %vm915 = vmor %vm913, %vm914
        %v916 = vsel %vm915, %v908, %v912
        %v917 = vand.u32 2147483647, %v906
        %vm918 = vcmp.eq.f32.partialorder %v917, 8.507059e+37
        %v919 = vand.u32 %v906, 2147483648
        %v920 = vor.u32 1.1754944e-38, %v919
        %v921 = vsel %vm918, %v920, %v916
        %v922 = vmul.f32 1.0, %v921
        %v923 = vrcp.pop %v907
        %v924 = vmul.f32 %v907, %v923
        %v925 = vsub.f32 1.0, %v924
        %v926 = vmul.f32 %v923, %v925
        %v927 = vadd.f32 %v923, %v926
        %vm928 = vweird.f32 %v907
        %vm929 = vweird.f32 %v923
        %vm930 = vmor %vm928, %vm929
        %v931 = vsel %vm930, %v923, %v927
        %v932 = vand.u32 2147483647, %v907
        %vm933 = vcmp.eq.f32.partialorder %v932, 8.507059e+37
        %v934 = vand.u32 %v907, 2147483648
        %v935 = vor.u32 1.1754944e-38, %v934
        %v936 = vsel %vm933, %v935, %v931
        %v937 = vmul.f32 1.0, %v936
        %v938 = vtanh.pop %v894
        %v939 = vtanh.pop %v895
        %v940 = vmul.f32 %v922, %v938
        %v941 = vmul.f32 %v937, %v939
        %942 = vst [vmem:[%s344] sm:$0xff] %v894
        %943 = vst [vmem:[%s344 + $0x8] sm:$0xff] %v895
        %944 = vst [vmem:[%s351] sm:$0xff] %v940
        %945 = vst [vmem:[%s351 + $0x8] sm:$0xff] %v941
        %s946 = sand.u32 %s213, 1
        %s947 = scalar_lea.sflag [#allocation3], %s946
        %s948 = sand.u32 %s213, 1
        %s949 = smul.addr %s948, 16
        %s950 = scalar_lea.vmem [#allocation2], %s949
        %s951 = sand.u32 %s239, 1
        %s952 = scalar_lea.sflag [#allocation5], %s951
        %s953 = sand.u32 %s239, 1
        %s954 = smul.addr %s953, 16
        %s955 = scalar_lea.vmem [#allocation4], %s954
        // Predicated region
        $region53: #{tpu_custom_call.1} parent=51 // pred_check
          %p956 = pneg %p223
        $region54: #{tpu_custom_call.1} parent=51 // pred_check_branch
          %958 = sbr.rel (%p956) target = $region56
        $region55: #{tpu_custom_call.1} parent=51 // pred_region
          %960 = vsyncadd %s947, 0
          %s961 = smul.addr %s27, 2
          %s962 = smul.addr %s961, 8
          %s963 = scalar_lea.hbm %s8, %s962
          %s965 = sshll.u32 %s950, 4
          %s966 = int_to_ptr.vmem [resolvable:$true] %s965
          %s967 = sshll.u32 %s963, 4
          %s968 = int_to_ptr.hbm [resolvable:$true] %s967
          %970 = dma.vmem_to_hbm [thread:$0]  %s966, 256, %s968, %s947
        $region56: #{tpu_custom_call.1} parent=51 // pred_fallthru
          _
        // Predicated region
        $region57: #{tpu_custom_call.1} parent=51 // pred_check
          %p971 = pneg %p249
        $region58: #{tpu_custom_call.1} parent=51 // pred_check_branch
          %973 = sbr.rel (%p971) target = $region60
        $region59: #{tpu_custom_call.1} parent=51 // pred_region
          %975 = vsyncadd %s952, 0
          %s976 = smul.addr %s27, 2
          %s977 = smul.addr %s976, 8
          %s978 = scalar_lea.hbm %s9, %s977
          %s980 = sshll.u32 %s955, 4
          %s981 = int_to_ptr.vmem [resolvable:$true] %s980
          %s982 = sshll.u32 %s978, 4
          %s983 = int_to_ptr.hbm [resolvable:$true] %s982
          %985 = dma.vmem_to_hbm [thread:$0]  %s981, 256, %s983, %s952
        $region60: #{tpu_custom_call.1} parent=51 // pred_fallthru
          _
      $region52: #{tpu_custom_call.1} parent=5 // pred_fallthru
        _
      %p986 = scmp.le.s32.totalorder 2, %s22
      // Predicated region
      $region61: #{tpu_custom_call.1} parent=5 // pred_check
        %p987 = pneg %p986
      $region62: #{tpu_custom_call.1} parent=5 // pred_check_branch
        %989 = sbr.rel (%p987) target = $region64
      $region63: #{tpu_custom_call.1} parent=5 // pred_region
        %s990 = ssub.s32 %s22, 2
        // Predicated region
        $region65: #{tpu_custom_call.1} parent=63 // pred_check
          %p991 = pneg %p229
        $region66: #{tpu_custom_call.1} parent=63 // pred_check_branch
          %993 = sbr.rel (%p991) target = $region68
        $region67: #{tpu_custom_call.1} parent=63 // pred_region
          %s994 = sand.u32 %s214, 1
          %s995 = scalar_lea.sflag [#allocation3], %s994
          %s996 = sand.u32 %s214, 1
          %s997 = smul.addr %s996, 16
          %s998 = scalar_lea.vmem [#allocation2], %s997
          %1000 = dma.done %s995, 256
        $region68: #{tpu_custom_call.1} parent=63 // pred_fallthru
          _
        // Predicated region
        $region69: #{tpu_custom_call.1} parent=63 // pred_check
          %p1001 = pneg %p255
        $region70: #{tpu_custom_call.1} parent=63 // pred_check_branch
          %1003 = sbr.rel (%p1001) target = $region72
        $region71: #{tpu_custom_call.1} parent=63 // pred_region
          %s1004 = sand.u32 %s240, 1
          %s1005 = scalar_lea.sflag [#allocation5], %s1004
          %s1006 = sand.u32 %s240, 1
          %s1007 = smul.addr %s1006, 16
          %s1008 = scalar_lea.vmem [#allocation4], %s1007
          %1010 = dma.done %s1005, 256
        $region72: #{tpu_custom_call.1} parent=63 // pred_fallthru
          _
      $region64: #{tpu_custom_call.1} parent=5 // pred_fallthru
        _
    $region6: #{tpu_custom_call.1} parent=1 // loop_footer
      %s26 = sadd.s32 1, %s22
    $region7: #{tpu_custom_call.1} parent=1 // loop_footer_branch
      %21 = sbr.rel target = $region3
    $region8: #{tpu_custom_call.1} parent=1 // loop_exit
      _
    %1011 = vsyncpa [#allocation3], 1
    %s1012 = scalar_lea.sflag [#allocation3], 1
    %1013 = vsyncpa %s1012, 1
    %1014 = vsyncpa [#allocation5], 1
    %s1015 = scalar_lea.sflag [#allocation5], 1
    %1016 = vsyncpa %s1015, 1

</llo_original>
